<compile_context>
chip_gen: v6e
topology: v6e:2x2x1
jax: 0.10.0
libtpu: 0.0.40
codegen_flags: <defaults>
</compile_context>

<pallas_src>
import jax
import jax.numpy as jnp
from jax.experimental import pallas as pl
from jax.experimental.pallas import tpu as pltpu


def _span_embedder_kernel_d(seq_ref, logits_ref, starts_ref, ends_ref, smask_ref,
                            ffnn_w_ref, ffnn_b_ref, out_ref):
    """Attend-then-project path: (TN,S)x(S,D) then (TN,D)x(D,Hp)."""
    seq = seq_ref[0]               # (S, D)  bf16
    logits_row = logits_ref[0]     # (1, S)  f32, lane-major token logits
    starts = starts_ref[0]         # (TN, 1) int32 (inclusive)
    ends = ends_ref[0]             # (TN, 1) int32 (inclusive)
    smask = smask_ref[0]           # (TN, 1) f32

    S = seq.shape[0]
    TN = starts.shape[0]

    pos = jax.lax.broadcasted_iota(jnp.int32, (TN, S), 1)
    in_span = (pos >= starts) & (pos <= ends)                 # (TN, S)

    # Shared-exp masked softmax: one exp over (1,S) instead of (TN,S).
    gmax = jnp.max(logits_row, axis=-1, keepdims=True)        # (1, 1)
    exp_row = jnp.exp(logits_row - gmax)                      # (1, S)
    e = jnp.where(in_span, exp_row, 0.0)                      # (TN, S)
    denom = jnp.sum(e, axis=-1, keepdims=True)                # (TN, 1)
    # Clamp: empty (degenerate / padded / underflowed) spans -> weights stay 0, no NaN.
    inv = pl.reciprocal(jnp.maximum(denom, jnp.float32(1e-30)), approx=True)
    weights = e * (inv * smask)                                # span mask folded in

    attended = jnp.dot(weights.astype(jnp.bfloat16), seq,
                       preferred_element_type=jnp.float32)     # (TN, D) f32
    proj = jnp.dot(attended.astype(jnp.bfloat16), ffnn_w_ref[...],
                   preferred_element_type=jnp.float32)         # (TN, Hp) f32
    out_ref[0] = jnp.tanh(proj + ffnn_b_ref[...]).astype(out_ref.dtype)


def _span_embedder_kernel_s(p_ref, logits_ref, starts_ref, ends_ref, smask_ref,
                            ffnn_b_ref, out_ref):
    """Project-then-attend path: single (TN,S)x(S,Hp) matmul against P = seq @ ffnn_w."""
    p = p_ref[0]                   # (S, Hp) bf16 : seq @ ffnn_w
    logits_row = logits_ref[0]     # (1, S)  f32
    starts = starts_ref[0]         # (TN, 1) int32 (inclusive)
    ends = ends_ref[0]             # (TN, 1) int32 (inclusive)
    smask = smask_ref[0]           # (TN, 1) f32

    S = p.shape[0]
    TN = starts.shape[0]

    pos = jax.lax.broadcasted_iota(jnp.int32, (TN, S), 1)
    in_span = (pos >= starts) & (pos <= ends)                  # (TN, S)

    gmax = jnp.max(logits_row, axis=-1, keepdims=True)
    exp_row = jnp.exp(logits_row - gmax)
    e = jnp.where(in_span, exp_row, 0.0)
    denom = jnp.sum(e, axis=-1, keepdims=True)
    inv = pl.reciprocal(jnp.maximum(denom, jnp.float32(1e-30)), approx=True)
    weights = e * (inv * smask)                                 # span mask folded in

    proj = jnp.dot(weights.astype(jnp.bfloat16), p,
                   preferred_element_type=jnp.float32)          # (TN, Hp) f32
    out_ref[0] = jnp.tanh(proj + ffnn_b_ref[...]).astype(out_ref.dtype)


def _round_up(x, m):
    return (x + m - 1) // m * m


def _cdiv(a, b):
    return -(-a // b)


def span_embedder(seq, span_indices, span_mask, params, *,
                  span_end_is_exclusive=True, contract_over="auto",
                  max_span_tile=128, out_dtype=jnp.float32):
    """seq: (B,S,D) f32; span_indices: (B,N,2) int; span_mask: (B,N) -> (B,N,H)."""
    B, S, D = seq.shape
    N = span_indices.shape[1]
    H = params["ffnn_w"].shape[1]

    starts = span_indices[..., 0:1].astype(jnp.int32)          # (B, N, 1)
    ends = span_indices[..., 1:2].astype(jnp.int32)            # (B, N, 1)
    if span_end_is_exclusive:
        ends = ends - 1                                         # make inclusive
    smask = span_mask.astype(jnp.float32).reshape(B, N, 1)

    # Hoisted token-logit Linear(D,1), fed lane-major as (B,1,S); HIGHEST precision to
    # track the PyTorch f32 path.
    logits = (jnp.einsum("bsd,do->bos", seq, params["attn_w"],
                         precision=jax.lax.Precision.HIGHEST)
              + params["attn_b"][0, 0]).astype(jnp.float32)     # (B, 1, S)

    # Span-tile size: multiple of 8 sublanes, sized to minimize padding of N.
    n_tiles = _cdiv(N, max_span_tile)
    tn = _round_up(_cdiv(N, n_tiles), 8)
    Np = _round_up(N, tn)
    # Lane-dense output stores: pad the hidden dim to a multiple of 128.
    Hp = _round_up(H, 128)

    def pad_n(x, value):
        if Np == N:
            return x
        return jnp.pad(x, ((0, 0), (0, Np - N), (0, 0)), constant_values=value)

    starts_p = pad_n(starts, 0)
    ends_p = pad_n(ends, -1)          # padded spans are empty -> zero weights in kernel
    smask_p = pad_n(smask, 0.0)

    ffnn_b = params["ffnn_b"].astype(jnp.float32).reshape(1, H)
    if Hp != H:
        ffnn_b = jnp.pad(ffnn_b, ((0, 0), (0, Hp - H)))

    if contract_over == "auto":
        # Project-then-attend when the D contraction would under-fill the MXU or the
        # span count dominates the sequence length.
        contract_over = "s" if (D <= 128 or N >= S) else "d"

    out_bytes = jnp.dtype(out_dtype).itemsize
    f32b, bf16b, lane = 4, 2, 128

    # VMEM footprint estimate (double-buffered blocks + live f32 intermediates).
    common = (2 * 8 * _round_up(S, lane) * f32b        # logits block (sublane/lane padded)
              + 3 * 2 * tn * lane * f32b               # starts/ends/smask (lane padded)
              + 2 * Hp * f32b                          # bias
              + 2 * tn * Hp * out_bytes                # output
              + 6 * tn * S * f32b                      # softmax intermediates
              + tn * Hp * f32b)                        # projection accumulator
    if contract_over == "d":
        footprint = common + 2 * S * D * bf16b + 2 * D * Hp * bf16b + tn * D * f32b
    else:
        footprint = common + 2 * S * Hp * bf16b
    vmem_limit = int(min(max(2 * footprint, 32 * 1024 * 1024), 110 * 1024 * 1024))

    grid = (B, Np // tn)
    transcendentals = int(B * (Np // tn) * S + B * Np * Hp)

    scalar_specs = [
        pl.BlockSpec((1, tn, 1), lambda b, n: (b, n, 0)),   # starts
        pl.BlockSpec((1, tn, 1), lambda b, n: (b, n, 0)),   # ends (inclusive)
        pl.BlockSpec((1, tn, 1), lambda b, n: (b, n, 0)),   # span mask
    ]
    logits_spec = pl.BlockSpec((1, 1, S), lambda b, n: (b, 0, 0))
    bias_spec = pl.BlockSpec((1, Hp), lambda b, n: (0, 0))
    out_spec = pl.BlockSpec((1, tn, Hp), lambda b, n: (b, n, 0))

    # TODO(synk): for very long sequences (v7x 64 MiB VMEM) add an S-tiled online-softmax
    # ("arbitrary" grid axis + m/l/acc scratch) and single-buffer the grid-invariant
    # operands (ffnn_w / bias / logits) via pipeline_mode=pl.Buffered(1).
    if contract_over == "d":
        ffnn_w = params["ffnn_w"].astype(jnp.bfloat16)
        if Hp != H:
            ffnn_w = jnp.pad(ffnn_w, ((0, 0), (0, Hp - H)))
        seq_bf16 = seq.astype(jnp.bfloat16)

        cost = pl.CostEstimate(
            flops=int(2 * B * Np * S * D + 2 * B * Np * D * Hp),
            transcendentals=transcendentals,
            bytes_accessed=int(B * S * D * bf16b + B * S * f32b + 3 * B * Np * f32b
                               + D * Hp * bf16b + Hp * f32b + B * Np * Hp * out_bytes))
        kernel = _span_embedder_kernel_d
        in_specs = ([pl.BlockSpec((1, S, D), lambda b, n: (b, 0, 0)),   # seq (bf16)
                     logits_spec] + scalar_specs +
                    [pl.BlockSpec((D, Hp), lambda b, n: (0, 0)),        # ffnn weight (bf16)
                     bias_spec])
        operands = (seq_bf16, logits, starts_p, ends_p, smask_p, ffnn_w, ffnn_b)
    else:
        # Precompute P = seq @ ffnn_w per batch (full-width XLA GEMM, contraction over D).
        ffnn_w_pad = params["ffnn_w"]
        if Hp != H:
            ffnn_w_pad = jnp.pad(ffnn_w_pad, ((0, 0), (0, Hp - H)))
        p = jnp.einsum("bsd,dh->bsh", seq.astype(jnp.bfloat16),
                       ffnn_w_pad.astype(jnp.bfloat16),
                       preferred_element_type=jnp.float32).astype(jnp.bfloat16)  # (B,S,Hp)

        cost = pl.CostEstimate(
            flops=int(2 * B * Np * S * Hp),
            transcendentals=transcendentals,
            bytes_accessed=int(B * S * Hp * bf16b + B * S * f32b + 3 * B * Np * f32b
                               + Hp * f32b + B * Np * Hp * out_bytes))
        kernel = _span_embedder_kernel_s
        in_specs = ([pl.BlockSpec((1, S, Hp), lambda b, n: (b, 0, 0)),  # P (bf16)
                     logits_spec] + scalar_specs + [bias_spec])
        operands = (p, logits, starts_p, ends_p, smask_p, ffnn_b)

    out = pl.pallas_call(
        kernel,
        out_shape=jax.ShapeDtypeStruct((B, Np, Hp), out_dtype),
        grid_spec=pltpu.PrefetchScalarGridSpec(
            num_scalar_prefetch=0,
            grid=grid,
            in_specs=in_specs,
            out_specs=out_spec,
        ),
        compiler_params=pltpu.CompilerParams(
            dimension_semantics=("parallel", "parallel"),
            vmem_limit_bytes=vmem_limit),
        cost_estimate=cost,
    )(*operands)

    return out[:, :N, :H]


def _reference_f32(seq, span_indices, span_mask, params):
    """Pure-f32 JAX reference mirroring SelfAttentiveSpanExtractor + FeedForward."""
    B, S, D = seq.shape
    starts = span_indices[..., 0]
    ends = span_indices[..., 1] - 1  # exclusive -> inclusive
    logits = seq @ params["attn_w"][:, 0] + params["attn_b"][0, 0]       # (B, S)
    pos = jnp.arange(S)
    mask = (pos[None, None, :] >= starts[..., None]) & (pos[None, None, :] <= ends[..., None])
    ml = jnp.where(mask, logits[:, None, :], -1e30)
    w = jax.nn.softmax(ml, axis=-1)
    w = jnp.where(mask, w, 0.0)
    att = jnp.einsum("bns,bsd->bnd", w, seq) * span_mask[..., None]
    return jnp.tanh(att @ params["ffnn_w"] + params["ffnn_b"][0])


def _reference_bf16_matched(seq, span_indices, span_mask, params):
    """Reference with the same bf16-operand / f32-accumulation policy as the 'd' path."""
    B, S, D = seq.shape
    starts = span_indices[..., 0]
    ends = span_indices[..., 1] - 1
    logits = jnp.einsum("bsd,do->bos", seq, params["attn_w"])[:, 0, :] + params["attn_b"][0, 0]
    pos = jnp.arange(S)
    mask = (pos[None, None, :] >= starts[..., None]) & (pos[None, None, :] <= ends[..., None])
    ml = jnp.where(mask, logits[:, None, :], -1e30)
    m = jnp.max(ml, axis=-1, keepdims=True)
    e = jnp.where(mask, jnp.exp(ml - m), 0.0)
    denom = jnp.maximum(jnp.sum(e, axis=-1, keepdims=True), 1e-30)
    w = (e / denom) * span_mask[..., None]
    att = jnp.einsum("bns,bsd->bnd", w.astype(jnp.bfloat16), seq.astype(jnp.bfloat16),
                     preferred_element_type=jnp.float32)
    proj = jnp.einsum("bnd,dh->bnh", att.astype(jnp.bfloat16),
                      params["ffnn_w"].astype(jnp.bfloat16),
                      preferred_element_type=jnp.float32)
    return jnp.tanh(proj + params["ffnn_b"][0])


if __name__ == "__main__":
    B, S, D, N, H = 2, 16, 32, 8, 32

    key = jax.random.PRNGKey(0)
    k_seq, k_aw, k_fw, k_fb, k_st, k_wd = jax.random.split(key, 6)

    seq = jax.random.normal(k_seq, (B, S, D), dtype=jnp.float32)

    # Deterministic parameter init (shapes from SpanEmbedder.__init__)
    params = {
        "attn_w": 0.1 * jax.random.normal(k_aw, (D, 1), dtype=jnp.float32),
        "attn_b": jnp.zeros((1, 1), dtype=jnp.float32),
        "ffnn_w": 0.1 * jax.random.normal(k_fw, (D, H), dtype=jnp.float32),
        "ffnn_b": 0.1 * jax.random.normal(k_fb, (1, H), dtype=jnp.float32),
    }

    # Spans with exclusive ends: start in [0, S-4], width in [1, 4]
    starts = jax.random.randint(k_st, (B, N), 0, S - 4)
    widths = jax.random.randint(k_wd, (B, N), 1, 5)
    ends_excl = jnp.minimum(starts + widths, S)
    span_indices = jnp.stack([starts, ends_excl], axis=-1).astype(jnp.int32)  # (B, N, 2)

    # Mask out the last span of each batch element AND make it degenerate
    # (exclusive end == start -> empty span) to exercise the NaN guard.
    span_indices = span_indices.at[:, N - 1, 0].set(3)
    span_indices = span_indices.at[:, N - 1, 1].set(3)
    span_mask = (jnp.arange(N)[None, :] < N - 1).astype(jnp.float32).repeat(B, axis=0)

    out_auto = jax.block_until_ready(span_embedder(seq, span_indices, span_mask, params))
    out_s = jax.block_until_ready(
        span_embedder(seq, span_indices, span_mask, params, contract_over="s"))
    out_d = jax.block_until_ready(
        span_embedder(seq, span_indices, span_mask, params, contract_over="d"))

    for o in (out_auto, out_s, out_d):
        assert o.shape == (B, N, H)
        assert bool(jnp.all(jnp.isfinite(o))), "NaN/Inf in kernel output"

    ref_m = _reference_bf16_matched(seq, span_indices, span_mask, params)
    ref_f = _reference_f32(seq, span_indices, span_mask, params)

    assert jnp.allclose(out_d, ref_m, atol=2e-2), "d-path mismatch vs bf16-matched reference"
    assert jnp.allclose(out_d, ref_f, atol=6e-2), "d-path mismatch vs f32 reference"
    assert jnp.allclose(out_s, ref_f, atol=6e-2), "s-path mismatch vs f32 reference"
    assert jnp.allclose(out_s, out_d, atol=3e-2), "s-path vs d-path mismatch"
    assert jnp.allclose(out_auto, out_s, atol=1e-6), "auto path selection mismatch"

    print("KERNEL_OK")
</pallas_src>

<mosaic_0001>
module attributes {stable_mosaic.version = 11 : i64} {
  func.func @_span_embedder_kernel_s(%arg0: i32, %arg1: i32, %arg2: memref<1x16x128xbf16, #tpu.memory_space<vmem>>, %arg3: memref<1x1x16xf32, #tpu.memory_space<vmem>>, %arg4: memref<1x8x1xi32, #tpu.memory_space<vmem>>, %arg5: memref<1x8x1xi32, #tpu.memory_space<vmem>>, %arg6: memref<1x8x1xf32, #tpu.memory_space<vmem>>, %arg7: memref<1x128xf32, #tpu.memory_space<vmem>>, %arg8: memref<1x8x128xf32, #tpu.memory_space<vmem>>) attributes {dimension_semantics = [#tpu.dimension_semantics<parallel>, #tpu.dimension_semantics<parallel>], iteration_bounds = array<i64: 2, 1>, scalar_prefetch = 0 : i64, scratch_operands = 0 : i64, tpu.core_type = #tpu.core_type<tc>, window_params = [{transform_indices = @transform_0, window_bounds = array<i64: 1, 16, 128>}, {transform_indices = @transform_1, window_bounds = array<i64: 1, 1, 16>}, {transform_indices = @transform_2, window_bounds = array<i64: 1, 8, 1>}, {transform_indices = @transform_3, window_bounds = array<i64: 1, 8, 1>}, {transform_indices = @transform_4, window_bounds = array<i64: 1, 8, 1>}, {pipeline_mode = #tpu.pipeline_mode<synchronous>, transform_indices = @transform_5, window_bounds = array<i64: 1, 128>}, {transform_indices = @transform_6, window_bounds = array<i64: 1, 8, 128>}]} {
    %c0 = arith.constant 0 : index
    %c0_0 = arith.constant 0 : index
    %c0_1 = arith.constant 0 : index
    %0 = vector.load %arg2[%c0, %c0_0, %c0_1] : memref<1x16x128xbf16, #tpu.memory_space<vmem>>, vector<1x16x128xbf16>
    %1 = vector.shape_cast %0 : vector<1x16x128xbf16> to vector<16x128xbf16>
    %c0_2 = arith.constant 0 : index
    %c0_3 = arith.constant 0 : index
    %c0_4 = arith.constant 0 : index
    %2 = vector.load %arg3[%c0_2, %c0_3, %c0_4] : memref<1x1x16xf32, #tpu.memory_space<vmem>>, vector<1x1x16xf32>
    %3 = vector.shape_cast %2 : vector<1x1x16xf32> to vector<1x16xf32>
    %c0_5 = arith.constant 0 : index
    %c0_6 = arith.constant 0 : index
    %c0_7 = arith.constant 0 : index
    %4 = vector.load %arg4[%c0_5, %c0_6, %c0_7] : memref<1x8x1xi32, #tpu.memory_space<vmem>>, vector<1x8x1xi32>
    %5 = vector.shape_cast %4 : vector<1x8x1xi32> to vector<8x1xi32>
    %c0_8 = arith.constant 0 : index
    %c0_9 = arith.constant 0 : index
    %c0_10 = arith.constant 0 : index
    %6 = vector.load %arg5[%c0_8, %c0_9, %c0_10] : memref<1x8x1xi32, #tpu.memory_space<vmem>>, vector<1x8x1xi32>
    %7 = vector.shape_cast %6 : vector<1x8x1xi32> to vector<8x1xi32>
    %c0_11 = arith.constant 0 : index
    %c0_12 = arith.constant 0 : index
    %c0_13 = arith.constant 0 : index
    %8 = vector.load %arg6[%c0_11, %c0_12, %c0_13] : memref<1x8x1xf32, #tpu.memory_space<vmem>>, vector<1x8x1xf32>
    %9 = vector.shape_cast %8 : vector<1x8x1xf32> to vector<8x1xf32>
    %10 = tpu.iota {dimensions = array<i32: 1>} : vector<8x16xi32>
    %11 = vector.broadcast %5 : vector<8x1xi32> to vector<8x16xi32>
    %12 = arith.cmpi sge, %10, %11 : vector<8x16xi32>
    %13 = vector.broadcast %7 : vector<8x1xi32> to vector<8x16xi32>
    %14 = arith.cmpi sle, %10, %13 : vector<8x16xi32>
    %15 = arith.andi %12, %14 : vector<8x16xi1>
    %cst = arith.constant dense<0xFF800000> : vector<1xf32>
    %16 = vector.multi_reduction <maximumf>, %3, %cst [1] : vector<1x16xf32> to vector<1xf32>
    %17 = vector.shape_cast %16 : vector<1xf32> to vector<1x1xf32>
    %18 = vector.broadcast %17 : vector<1x1xf32> to vector<1x16xf32>
    %19 = arith.subf %3, %18 : vector<1x16xf32>
    %20 = math.exp %19 : vector<1x16xf32>
    %cst_14 = arith.constant 0.000000e+00 : f32
    %21 = vector.shape_cast %20 : vector<1x16xf32> to vector<1x16xf32>
    %22 = vector.broadcast %21 : vector<1x16xf32> to vector<8x16xf32>
    %23 = vector.broadcast %cst_14 : f32 to vector<8x16xf32>
    %24 = arith.select %15, %22, %23 : vector<8x16xi1>, vector<8x16xf32>
    %cst_15 = arith.constant dense<0.000000e+00> : vector<8xf32>
    %25 = vector.multi_reduction <add>, %24, %cst_15 [1] : vector<8x16xf32> to vector<8xf32>
    %26 = vector.shape_cast %25 : vector<8xf32> to vector<8x1xf32>
    %cst_16 = arith.constant 1.000000e-30 : f32
    %27 = vector.broadcast %cst_16 : f32 to vector<8x1xf32>
    %28 = arith.maximumf %26, %27 : vector<8x1xf32>
    %29 = tpu.reciprocal %28 {approx = true} : vector<8x1xf32> -> vector<8x1xf32>
    %30 = arith.mulf %29, %9 : vector<8x1xf32>
    %31 = vector.broadcast %30 : vector<8x1xf32> to vector<8x16xf32>
    %32 = arith.mulf %24, %31 : vector<8x16xf32>
    %33 = arith.truncf %32 : vector<8x16xf32> to vector<8x16xbf16>
    %cst_17 = arith.constant dense<0.000000e+00> : vector<8x128xf32>
    %34 = tpu.matmul %33, %1, %cst_17 {dimension_numbers = #tpu.dot_dimension_numbers<[1], [0], [0], [1], [0, 0, 1, 1], [], []>} : vector<8x16xbf16>, vector<16x128xbf16>, vector<8x128xf32> -> vector<8x128xf32>
    %c0_18 = arith.constant 0 : index
    %c0_19 = arith.constant 0 : index
    %35 = vector.load %arg7[%c0_18, %c0_19] : memref<1x128xf32, #tpu.memory_space<vmem>>, vector<1x128xf32>
    %36 = vector.broadcast %35 : vector<1x128xf32> to vector<8x128xf32>
    %37 = arith.addf %34, %36 : vector<8x128xf32>
    %38 = math.tanh %37 : vector<8x128xf32>
    %c0_20 = arith.constant 0 : index
    %c0_21 = arith.constant 0 : index
    %c0_22 = arith.constant 0 : index
    %39 = vector.load %arg8[%c0_20, %c0_21, %c0_22] : memref<1x8x128xf32, #tpu.memory_space<vmem>>, vector<1x8x128xf32>
    %40 = vector.shape_cast %39 : vector<1x8x128xf32> to vector<8x128xf32>
    %41 = vector.shape_cast %38 : vector<8x128xf32> to vector<1x8x128xf32>
    tpu.vector_store %arg8[%c0_20, %c0_21, %c0_22], %41 {strides = array<i32>} : memref<1x8x128xf32, #tpu.memory_space<vmem>>, vector<1x8x128xf32>,
    return
  }
  func.func @transform_0(%arg0: i32, %arg1: i32) -> (i32, i32, i32) {
    %c0_i32 = arith.constant 0 : i32
    %c0_i32_0 = arith.constant 0 : i32
    %c0_i32_1 = arith.constant 0 : i32
    return %arg0, %c0_i32, %c0_i32_0 : i32, i32, i32
  }
  func.func @transform_1(%arg0: i32, %arg1: i32) -> (i32, i32, i32) {
    %c0_i32 = arith.constant 0 : i32
    %c0_i32_0 = arith.constant 0 : i32
    %c0_i32_1 = arith.constant 0 : i32
    return %arg0, %c0_i32, %c0_i32_0 : i32, i32, i32
  }
  func.func @transform_2(%arg0: i32, %arg1: i32) -> (i32, i32, i32) {
    %c0_i32 = arith.constant 0 : i32
    %c0_i32_0 = arith.constant 0 : i32
    return %arg0, %arg1, %c0_i32 : i32, i32, i32
  }
  func.func @transform_3(%arg0: i32, %arg1: i32) -> (i32, i32, i32) {
    %c0_i32 = arith.constant 0 : i32
    %c0_i32_0 = arith.constant 0 : i32
    return %arg0, %arg1, %c0_i32 : i32, i32, i32
  }
  func.func @transform_4(%arg0: i32, %arg1: i32) -> (i32, i32, i32) {
    %c0_i32 = arith.constant 0 : i32
    %c0_i32_0 = arith.constant 0 : i32
    return %arg0, %arg1, %c0_i32 : i32, i32, i32
  }
  func.func @transform_5(%arg0: i32, %arg1: i32) -> (i32, i32) {
    %c0_i32 = arith.constant 0 : i32
    %c0_i32_0 = arith.constant 0 : i32
    %c0_i32_1 = arith.constant 0 : i32
    return %c0_i32, %c0_i32_0 : i32, i32
  }
  func.func @transform_6(%arg0: i32, %arg1: i32) -> (i32, i32, i32) {
    %c0_i32 = arith.constant 0 : i32
    %c0_i32_0 = arith.constant 0 : i32
    return %arg0, %arg1, %c0_i32 : i32, i32, i32
  }
}

</mosaic_0001>

<llo_original>
// kernel: tpu_custom_call.1
$region0: #{tpu_custom_call.1}
  #allocation0 [shape = 'u32[]', space=smem, size = 0x4, offset = 0x4, fixed_abs, tag = 'smem constant byte address 0x4 - core index']
  #allocation1 [shape = 'u32[144,128]{1,0:T(1,128)}', space=vmem, size = 0x12000, scoped, tag = 'internal scratch']
  %s0 = inlined_call_operand.vmem [shape: bf16[2,16,128], index: 0, kind: input, shape index: {}]
  %s1 = inlined_call_operand.vmem [shape: f32[2,1,16], index: 1, kind: input, shape index: {}]
  %s2 = inlined_call_operand.vmem [shape: s32[2,8,1], index: 2, kind: input, shape index: {}]
  %s3 = inlined_call_operand.vmem [shape: s32[2,8,1], index: 3, kind: input, shape index: {}]
  %s4 = inlined_call_operand.vmem [shape: f32[2,8,1], index: 4, kind: input, shape index: {}]
  %s5 = inlined_call_operand.vmem [shape: f32[1,128], index: 5, kind: input, shape index: {}]
  %s6 = inlined_call_operand.hbm [shape: f32[2,8,128], index: 6, kind: output, shape index: {}]
  %s7 = sld [smem:[#allocation0]]
  $region57: #{tpu_custom_call.1} parent=0
    _
  %s9 = ssub.s32 1, %s7
  %s10 = scalar_select 0, %s9, %s7
  $region1: #{tpu_custom_call.1} parent=0
    #allocation2 [shape = 'u8[8192]{0}', space=vmem, size = 0x2000, scoped, tag = 'output window, operand 0']
    #allocation3 [shape = 's32[2]{0}', space=sflag, size = 0x8, scoped, tag = 'scoped memory for tpu_custom_call.1']
    %11 = vsyncpa [#allocation3], 0
    %s12 = scalar_lea.sflag [#allocation3], 1
    %13 = vsyncpa %s12, 0
    loop: start=0, step=1, limit=4
    $region2: #{tpu_custom_call.1} parent=1 // loop_pre_header
      _
    $region3: #{tpu_custom_call.1} parent=1 // loop_header
      %s15 = sphi 0, %s19
      %p16 = scmp.ge.s32.totalorder %s15, 4
      %s22 = sphi 0, %s34
      %s23 = sphi 0, %s30
      %s24 = sphi 0, %s22
      %s25 = sphi 0, %s23
      %s26 = sphi 0, %s24
      %s27 = sphi 0, %s25
      %s37 = sphi 0, %s39
      %s40 = sphi 0, %s37
      %s41 = sphi 0, %s40
      %s57 = sphi 0, %s41
      %s63 = sphi 0, %s65
      %s66 = sphi 0, %s63
      %s67 = sphi 0, %s66
      %s83 = sphi 0, %s67
      %s91 = sphi 0, %s93
      %s94 = sphi 0, %s91
      %s95 = sphi 0, %s94
      %s111 = sphi 0, %s95
      %s119 = sphi 0, %s121
      %s122 = sphi 0, %s119
      %s123 = sphi 0, %s122
      %s139 = sphi 0, %s123
      %s147 = sphi 0, %s149
      %s150 = sphi 0, %s147
      %s151 = sphi 0, %s150
      %s167 = sphi 0, %s151
      %s171 = sphi 0, %s171
      %s173 = sphi 0, %s171
      %s174 = sphi 0, %s173
      %s188 = sphi 0, %s174
      %s196 = sphi 0, %s198
      %s199 = sphi 0, %s196
      %s200 = sphi 0, %s199
      %s216 = sphi 0, %s200
    $region4: #{tpu_custom_call.1} parent=1 // loop_header_branch
      %18 = sbr.rel (%p16) target = $region8
    $region5: #{tpu_custom_call.1} parent=1 // loop_body
      %s20 = ssub.s32 %s15, 1
      %s21 = ssub.s32 %s15, 2
      %s28 = sadd.s32 1, %s23
      %p29 = scmp.ge.s32.totalorder %s28, 1
      %s30 = scalar_select %p29, 0, %s28
      %s31 = sadd.s32 1, %s22
      %s32 = scalar_select %p29, %s31, %s22
      %p33 = scmp.ge.s32.totalorder %s32, 2
      %s34 = scalar_select %p33, 0, %s32
      %s35 = ssub.s32 %s22, %s34
      %p36 = scmp.eq.s32.totalorder %s35, 0
      %s38 = sadd.s32 %s37, 1
      %s39 = scalar_select %p36, %s37, %s38
      %p42 = pneg %p36
      %p43 = scmp.eq.s32.totalorder %s15, 1
      %p44 = por %p42, %p43
      %p45 = scmp.ne.s32.totalorder %s37, %s40
      %p46 = scmp.eq.s32.totalorder %s15, 0
      %p47 = por %p45, %p46
      %p48 = scmp.ne.s32.totalorder %s37, %s40
      %p49 = scmp.eq.s32.totalorder %s20, 1
      %p50 = por %p48, %p49
      %p51 = scmp.ne.s32.totalorder %s40, %s41
      %p52 = scmp.eq.s32.totalorder %s20, 0
      %p53 = por %p51, %p52
      %p54 = scmp.ne.s32.totalorder %s40, %s41
      %p55 = scmp.eq.s32.totalorder %s21, 1
      %p56 = por %p54, %p55
      %p58 = scmp.ne.s32.totalorder %s41, %s57
      %p59 = scmp.eq.s32.totalorder %s21, 0
      %p60 = por %p58, %p59
      %s61 = ssub.s32 %s22, %s34
      %p62 = scmp.eq.s32.totalorder %s61, 0
      %s64 = sadd.s32 %s63, 1
      %s65 = scalar_select %p62, %s63, %s64
      %p68 = pneg %p62
      %p69 = scmp.eq.s32.totalorder %s15, 1
      %p70 = por %p68, %p69
      %p71 = scmp.ne.s32.totalorder %s63, %s66
      %p72 = scmp.eq.s32.totalorder %s15, 0
      %p73 = por %p71, %p72
      %p74 = scmp.ne.s32.totalorder %s63, %s66
      %p75 = scmp.eq.s32.totalorder %s20, 1
      %p76 = por %p74, %p75
      %p77 = scmp.ne.s32.totalorder %s66, %s67
      %p78 = scmp.eq.s32.totalorder %s20, 0
      %p79 = por %p77, %p78
      %p80 = scmp.ne.s32.totalorder %s66, %s67
      %p81 = scmp.eq.s32.totalorder %s21, 1
      %p82 = por %p80, %p81
      %p84 = scmp.ne.s32.totalorder %s67, %s83
      %p85 = scmp.eq.s32.totalorder %s21, 0
      %p86 = por %p84, %p85
      %s87 = ssub.s32 %s22, %s34
      %s88 = ssub.s32 %s23, %s30
      %s89 = sor.u32 %s87, %s88
      %p90 = scmp.eq.s32.totalorder %s89, 0
      %s92 = sadd.s32 %s91, 1
      %s93 = scalar_select %p90, %s91, %s92
      %p96 = pneg %p90
      %p97 = scmp.eq.s32.totalorder %s15, 1
      %p98 = por %p96, %p97
      %p99 = scmp.ne.s32.totalorder %s91, %s94
      %p100 = scmp.eq.s32.totalorder %s15, 0
      %p101 = por %p99, %p100
      %p102 = scmp.ne.s32.totalorder %s91, %s94
      %p103 = scmp.eq.s32.totalorder %s20, 1
      %p104 = por %p102, %p103
      %p105 = scmp.ne.s32.totalorder %s94, %s95
      %p106 = scmp.eq.s32.totalorder %s20, 0
      %p107 = por %p105, %p106
      %p108 = scmp.ne.s32.totalorder %s94, %s95
      %p109 = scmp.eq.s32.totalorder %s21, 1
      %p110 = por %p108, %p109
      %p112 = scmp.ne.s32.totalorder %s95, %s111
      %p113 = scmp.eq.s32.totalorder %s21, 0
      %p114 = por %p112, %p113
      %s115 = ssub.s32 %s22, %s34
      %s116 = ssub.s32 %s23, %s30
      %s117 = sor.u32 %s115, %s116
      %p118 = scmp.eq.s32.totalorder %s117, 0
      %s120 = sadd.s32 %s119, 1
      %s121 = scalar_select %p118, %s119, %s120
      %p124 = pneg %p118
      %p125 = scmp.eq.s32.totalorder %s15, 1
      %p126 = por %p124, %p125
      %p127 = scmp.ne.s32.totalorder %s119, %s122
      %p128 = scmp.eq.s32.totalorder %s15, 0
      %p129 = por %p127, %p128
      %p130 = scmp.ne.s32.totalorder %s119, %s122
      %p131 = scmp.eq.s32.totalorder %s20, 1
      %p132 = por %p130, %p131
      %p133 = scmp.ne.s32.totalorder %s122, %s123
      %p134 = scmp.eq.s32.totalorder %s20, 0
      %p135 = por %p133, %p134
      %p136 = scmp.ne.s32.totalorder %s122, %s123
      %p137 = scmp.eq.s32.totalorder %s21, 1
      %p138 = por %p136, %p137
      %p140 = scmp.ne.s32.totalorder %s123, %s139
      %p141 = scmp.eq.s32.totalorder %s21, 0
      %p142 = por %p140, %p141
      %s143 = ssub.s32 %s22, %s34
      %s144 = ssub.s32 %s23, %s30
      %s145 = sor.u32 %s143, %s144
      %p146 = scmp.eq.s32.totalorder %s145, 0
      %s148 = sadd.s32 %s147, 1
      %s149 = scalar_select %p146, %s147, %s148
      %p152 = pneg %p146
      %p153 = scmp.eq.s32.totalorder %s15, 1
      %p154 = por %p152, %p153
      %p155 = scmp.ne.s32.totalorder %s147, %s150
      %p156 = scmp.eq.s32.totalorder %s15, 0
      %p157 = por %p155, %p156
      %p158 = scmp.ne.s32.totalorder %s147, %s150
      %p159 = scmp.eq.s32.totalorder %s20, 1
      %p160 = por %p158, %p159
      %p161 = scmp.ne.s32.totalorder %s150, %s151
      %p162 = scmp.eq.s32.totalorder %s20, 0
      %p163 = por %p161, %p162
      %p164 = scmp.ne.s32.totalorder %s150, %s151
      %p165 = scmp.eq.s32.totalorder %s21, 1
      %p166 = por %p164, %p165
      %p168 = scmp.ne.s32.totalorder %s151, %s167
      %p169 = scmp.eq.s32.totalorder %s21, 0
      %p170 = por %p168, %p169
      %s172 = sadd.s32 %s171, 1
      %p175 = scmp.eq.s32.totalorder %s15, 1
      %p176 = scmp.ne.s32.totalorder %s171, %s173
      %p177 = scmp.eq.s32.totalorder %s15, 0
      %p178 = por %p176, %p177
      %p179 = scmp.ne.s32.totalorder %s171, %s173
      %p180 = scmp.eq.s32.totalorder %s20, 1
      %p181 = por %p179, %p180
      %p182 = scmp.ne.s32.totalorder %s173, %s174
      %p183 = scmp.eq.s32.totalorder %s20, 0
      %p184 = por %p182, %p183
      %p185 = scmp.ne.s32.totalorder %s173, %s174
      %p186 = scmp.eq.s32.totalorder %s21, 1
      %p187 = por %p185, %p186
      %p189 = scmp.ne.s32.totalorder %s174, %s188
      %p190 = scmp.eq.s32.totalorder %s21, 0
      %p191 = por %p189, %p190
      %s192 = ssub.s32 %s22, %s34
      %s193 = ssub.s32 %s23, %s30
      %s194 = sor.u32 %s192, %s193
      %p195 = scmp.eq.s32.totalorder %s194, 0
      %s197 = sadd.s32 %s196, 1
      %s198 = scalar_select %p195, %s196, %s197
      %p201 = pneg %p195
      %p202 = scmp.eq.s32.totalorder %s15, 1
      %p203 = por %p201, %p202
      %p204 = scmp.ne.s32.totalorder %s196, %s199
      %p205 = scmp.eq.s32.totalorder %s15, 0
      %p206 = por %p204, %p205
      %p207 = scmp.ne.s32.totalorder %s196, %s199
      %p208 = scmp.eq.s32.totalorder %s20, 1
      %p209 = por %p207, %p208
      %p210 = scmp.ne.s32.totalorder %s199, %s200
      %p211 = scmp.eq.s32.totalorder %s20, 0
      %p212 = por %p210, %p211
      %p213 = scmp.ne.s32.totalorder %s199, %s200
      %p214 = scmp.eq.s32.totalorder %s21, 1
      %p215 = por %p213, %p214
      %p217 = scmp.ne.s32.totalorder %s200, %s216
      %p218 = scmp.eq.s32.totalorder %s21, 0
      %p219 = por %p217, %p218
      %p220 = scmp.le.s32.totalorder 1, %s15
      %p221 = scmp.lt.s32.totalorder %s15, 3
      %p222 = pnand %p220, %p221
      %p223 = pneg %p222
      // Predicated region
      $region9: #{tpu_custom_call.1} parent=5 // pred_check
        _
      $region10: #{tpu_custom_call.1} parent=5 // pred_check_branch
        %225 = sbr.rel (%p222) target = $region12
      $region11: #{tpu_custom_call.1} parent=5 // pred_region
        %s226 = ssub.s32 %s15, 1
        // Predicated region
        $region13: #{tpu_custom_call.1} parent=11 // pred_check
          %p227 = pneg %p184
        $region14: #{tpu_custom_call.1} parent=11 // pred_check_branch
          %229 = sbr.rel (%p227) target = $region16
        $region15: #{tpu_custom_call.1} parent=11 // pred_region
          _
        $region16: #{tpu_custom_call.1} parent=11 // pred_fallthru
          _
      $region12: #{tpu_custom_call.1} parent=5 // pred_fallthru
        _
      %p230 = scmp.lt.s32.totalorder %s15, 2
      // Predicated region
      $region17: #{tpu_custom_call.1} parent=5 // pred_check
        %p231 = pneg %p230
      $region18: #{tpu_custom_call.1} parent=5 // pred_check_branch
        %233 = sbr.rel (%p231) target = $region20
      $region19: #{tpu_custom_call.1} parent=5 // pred_region
        // Predicated region
        $region21: #{tpu_custom_call.1} parent=19 // pred_check
          %p234 = pneg %p47
        $region22: #{tpu_custom_call.1} parent=19 // pred_check_branch
          %236 = sbr.rel (%p234) target = $region24
        $region23: #{tpu_custom_call.1} parent=19 // pred_region
          %p237 = scmp.lt.s32.totalorder %s22, 1
          %s238 = scalar_select %p237, %s22, 1
          %s239 = smul.addr %s238, 2
          %s240 = smul.addr %s239, 4
          %s241 = scalar_lea.vmem %s0, %s240
        $region24: #{tpu_custom_call.1} parent=19 // pred_fallthru
          _
        // Predicated region
        $region25: #{tpu_custom_call.1} parent=19 // pred_check
          %p242 = pneg %p73
        $region26: #{tpu_custom_call.1} parent=19 // pred_check_branch
          %244 = sbr.rel (%p242) target = $region28
        $region27: #{tpu_custom_call.1} parent=19 // pred_region
          %p245 = scmp.lt.s32.totalorder %s22, 1
          %s246 = scalar_select %p245, %s22, 1
          %s247 = scalar_lea.vmem %s1, %s246
        $region28: #{tpu_custom_call.1} parent=19 // pred_fallthru
          _
        // Predicated region
        $region29: #{tpu_custom_call.1} parent=19 // pred_check
          %p248 = pneg %p101
        $region30: #{tpu_custom_call.1} parent=19 // pred_check_branch
          %250 = sbr.rel (%p248) target = $region32
        $region31: #{tpu_custom_call.1} parent=19 // pred_region
          %p251 = scmp.lt.s32.totalorder %s22, 1
          %s252 = scalar_select %p251, %s22, 1
          %p253 = scmp.lt.s32.totalorder %s23, 0
          %s254 = scalar_select %p253, %s23, 0
          %s255 = sadd.s32 %s254, %s252
          %s256 = smul.addr %s255, 8
          %s257 = scalar_lea.vmem %s2, %s256
        $region32: #{tpu_custom_call.1} parent=19 // pred_fallthru
          _
        // Predicated region
        $region33: #{tpu_custom_call.1} parent=19 // pred_check
          %p258 = pneg %p129
        $region34: #{tpu_custom_call.1} parent=19 // pred_check_branch
          %260 = sbr.rel (%p258) target = $region36
        $region35: #{tpu_custom_call.1} parent=19 // pred_region
          %p261 = scmp.lt.s32.totalorder %s22, 1
          %s262 = scalar_select %p261, %s22, 1
          %p263 = scmp.lt.s32.totalorder %s23, 0
          %s264 = scalar_select %p263, %s23, 0
          %s265 = sadd.s32 %s264, %s262
          %s266 = smul.addr %s265, 8
          %s267 = scalar_lea.vmem %s3, %s266
        $region36: #{tpu_custom_call.1} parent=19 // pred_fallthru
          _
        // Predicated region
        $region37: #{tpu_custom_call.1} parent=19 // pred_check
          %p268 = pneg %p157
        $region38: #{tpu_custom_call.1} parent=19 // pred_check_branch
          %270 = sbr.rel (%p268) target = $region40
        $region39: #{tpu_custom_call.1} parent=19 // pred_region
          %p271 = scmp.lt.s32.totalorder %s22, 1
          %s272 = scalar_select %p271, %s22, 1
          %p273 = scmp.lt.s32.totalorder %s23, 0
          %s274 = scalar_select %p273, %s23, 0
          %s275 = sadd.s32 %s274, %s272
          %s276 = smul.addr %s275, 8
          %s277 = scalar_lea.vmem %s4, %s276
        $region40: #{tpu_custom_call.1} parent=19 // pred_fallthru
          _
      $region20: #{tpu_custom_call.1} parent=5 // pred_fallthru
        _
      %p278 = scmp.le.s32.totalorder 1, %s15
      %p279 = scmp.lt.s32.totalorder %s15, 3
      %p280 = pnand %p278, %p279
      %p281 = pneg %p280
      // Predicated region
      $region41: #{tpu_custom_call.1} parent=5 // pred_check
        _
      $region42: #{tpu_custom_call.1} parent=5 // pred_check_branch
        %283 = sbr.rel (%p280) target = $region44
      $region43: #{tpu_custom_call.1} parent=5 // pred_region
        %s284 = ssub.s32 %s15, 1
        %p285 = scmp.lt.s32.totalorder %s24, 1
        %s286 = scalar_select %p285, %s24, 1
        %s287 = smul.addr %s286, 2
        %s288 = smul.addr %s287, 4
        %s289 = scalar_lea.vmem %s0, %s288
        %p290 = pneg %p53
        %p291 = pneg %p50
        %p292 = scmp.lt.s32.totalorder %s24, 1
        %s293 = scalar_select %p292, %s24, 1
        %s294 = scalar_lea.vmem %s1, %s293
        %p295 = pneg %p79
        %p296 = pneg %p76
        %p297 = scmp.lt.s32.totalorder %s24, 1
        %s298 = scalar_select %p297, %s24, 1
        %p299 = scmp.lt.s32.totalorder %s25, 0
        %s300 = scalar_select %p299, %s25, 0
        %s301 = sadd.s32 %s300, %s298
        %s302 = smul.addr %s301, 8
        %s303 = scalar_lea.vmem %s2, %s302
        %p304 = pneg %p107
        %p305 = pneg %p104
        %p306 = scmp.lt.s32.totalorder %s24, 1
        %s307 = scalar_select %p306, %s24, 1
        %p308 = scmp.lt.s32.totalorder %s25, 0
        %s309 = scalar_select %p308, %s25, 0
        %s310 = sadd.s32 %s309, %s307
        %s311 = smul.addr %s310, 8
        %s312 = scalar_lea.vmem %s3, %s311
        %p313 = pneg %p135
        %p314 = pneg %p132
        %p315 = scmp.lt.s32.totalorder %s24, 1
        %s316 = scalar_select %p315, %s24, 1
        %p317 = scmp.lt.s32.totalorder %s25, 0
        %s318 = scalar_select %p317, %s25, 0
        %s319 = sadd.s32 %s318, %s316
        %s320 = smul.addr %s319, 8
        %s321 = scalar_lea.vmem %s4, %s320
        %p322 = pneg %p163
        %p323 = pneg %p160
        %p324 = pneg %p184
        %p325 = pneg %p181
        %p326 = pneg %p212
        %p327 = pneg %p209
        %s328 = sand.u32 %s199, 1
        %s329 = scalar_lea.sflag [#allocation3], %s328
        %s330 = sand.u32 %s199, 1
        %s331 = smul.addr %s330, 8
        %s332 = scalar_lea.vmem [#allocation2], %s331
        %p333 = scmp.lt.s32.totalorder %s24, 1
        %s334 = scalar_select %p333, %s24, 1
        %s335 = smul.addr %s334, 2
        %s336 = smul.addr %s335, 4
        %s337 = scalar_lea.vmem %s0, %s336
        %p338 = scmp.lt.s32.totalorder %s24, 1
        %s339 = scalar_select %p338, %s24, 1
        %s340 = scalar_lea.vmem %s1, %s339
        %p341 = scmp.lt.s32.totalorder %s24, 1
        %s342 = scalar_select %p341, %s24, 1
        %p343 = scmp.lt.s32.totalorder %s25, 0
        %s344 = scalar_select %p343, %s25, 0
        %s345 = sadd.s32 %s344, %s342
        %s346 = smul.addr %s345, 8
        %s347 = scalar_lea.vmem %s2, %s346
        %p348 = scmp.lt.s32.totalorder %s24, 1
        %s349 = scalar_select %p348, %s24, 1
        %p350 = scmp.lt.s32.totalorder %s25, 0
        %s351 = scalar_select %p350, %s25, 0
        %s352 = sadd.s32 %s351, %s349
        %s353 = smul.addr %s352, 8
        %s354 = scalar_lea.vmem %s3, %s353
        %p355 = scmp.lt.s32.totalorder %s24, 1
        %s356 = scalar_select %p355, %s24, 1
        %p357 = scmp.lt.s32.totalorder %s25, 0
        %s358 = scalar_select %p357, %s25, 0
        %s359 = sadd.s32 %s358, %s356
        %s360 = smul.addr %s359, 8
        %s361 = scalar_lea.vmem %s4, %s360
        %v363 = vld [vmem:[%s337] sm:$0xf]
        %v364 = vld [vmem:[%s337 + $0x4] sm:$0xf]
        %v365 = vld [vmem:[%s340] sm:$0x1]
        %v366 = vld [vmem:[%s347] sm:$0xff]
        %v367 = vld [vmem:[%s354] sm:$0xff]
        %v368 = vld [vmem:[%s361] sm:$0xff]
        %v369 = vlaneseq
        %v370 = vand.u32 %v369, 127
        %371 = vset.pattern.permute.xlu0 0
        %372 = vperm.xlu0 %371, %v366
        %v373 = vpop.permute.xlu0 %372
        %vm374 = vcmp.ge.s32.totalorder %v370, %v373
        %375 = vset.pattern.permute.xlu0 0
        %376 = vperm.xlu0 %375, %v367
        %v377 = vpop.permute.xlu0 %376
        %vm378 = vcmp.le.s32.totalorder %v370, %v377
        %vm379 = vmand %vm374, %vm378
        %vm380 = vcmask 122880
        %v381 = vsel %vm380, %v365, -inf
        %382 = vmax.xlane.f32.xlu0 %v381
        %v383 = vpop.xlane.xlu0 %382
        %v384 = vsub.f32 %v365, %v383
        %v385 = vmul.f32 %v384, 1.442695
        %v386 = vpow.pop %v385
        %v388 = vlaneseq
        %v389 = vshrl.u32 %v388, 7
        %v390 = vsub.s32 0, %v389
        %v391 = vrot.slane %v386, %v390
        %v393 = vsel %vm379, %v391, 0.0
        %vm394 = vcmask 130048
        %v395 = vsel %vm394, %v393, 0.0
        %396 = vadd.xlane.f32.xlu0 %v395
        %v397 = vpop.xlane.xlu0 %396
        %v398 = vmax.f32 %v397, 1e-30
        %v399 = vrcp.pop %v398
        %v400 = vmul.f32 %v399, %v368
        %402 = vset.pattern.permute.xlu0 0
        %403 = vperm.xlu0 %402, %v400
        %v404 = vpop.permute.xlu0 %403
        %v406 = vmul.f32 %v393, %v404
        %v407 = vpack.c.bf16 %v406, %v406
        %v408 = vld [vmem:[%s5] sm:$0x1]
        %v410 = vlaneseq
        %v411 = vshrl.u32 %v410, 7
        %v412 = vsub.s32 0, %v411
        %v413 = vrot.slane %v408, %v412
        %v417 = vunpack.c.l.b16 %v363
        %v418 = vunpack.c.l.b16 %v364
        %v419 = vpack.c.b16 %v418, %v417
        %v422 = vsel %vm394, %v407, 0
        %424 = vmatprep.subr.bf16.mxu0 0
        %425 = vmatpush1.bf16.msra.mxu0 0
        %426 = vmatprep.subr.bf16.mxu0 0
        %427 = vmatpush1.bf16.msra.mxu0 0
        %428 = vmatprep.subr.bf16.mxu0 0
        %429 = vmatpush1.bf16.msra.mxu0 0
        %430 = vmatprep.subr.bf16.mxu0 0
        %431 = vmatpush1.bf16.msra.mxu0 0
        %432 = vmatprep.subr.bf16.mxu0 0
        %433 = vmatpush1.bf16.msra.mxu0 0
        %434 = vmatprep.subr.bf16.mxu0 0
        %435 = vmatpush1.bf16.msra.mxu0 0
        %436 = vmatprep.subr.bf16.mxu0 0
        %437 = vmatpush1.bf16.msra.mxu0 0
        %438 = vmatprep.subr.bf16.mxu0 0
        %439 = vmatpush1.bf16.msra.mxu0 %v419
        %440 = vmatprep.subr.bf16.mxu0 0
        %441 = vmatpush2.bf16.msra.mxu0 0
        %442 = vmatprep.subr.bf16.mxu0 0
        %443 = vmatpush2.bf16.msra.mxu0 0
        %444 = vmatprep.subr.bf16.mxu0 0
        %445 = vmatpush2.bf16.msra.mxu0 0
        %446 = vmatprep.subr.bf16.mxu0 0
        %447 = vmatpush2.bf16.msra.mxu0 0
        %448 = vmatprep.subr.bf16.mxu0 0
        %449 = vmatpush2.bf16.msra.mxu0 0
        %450 = vmatprep.subr.bf16.mxu0 0
        %451 = vmatpush2.bf16.msra.mxu0 0
        %452 = vmatprep.subr.bf16.mxu0 0
        %453 = vmatpush2.bf16.msra.mxu0 0
        %454 = vmatprep.subr.bf16.mxu0 0
        %455 = vmatpush2.bf16.msra.mxu0 0
        %456 = vmatprep.mubr.bf16.mxu0 0
        %457 = vmatmul.mubr.bf16.gmra.mxu0 %v422
        %v458 = vpop.f32.mrf.mxu0
        %v459 = vadd.f32 %v413, %v458
        %v460 = vpop.f32.mrf.mxu0
        %v461 = vpop.f32.mrf.mxu0
        %v462 = vpop.f32.mrf.mxu0
        %463 = vdwg.mxu0
        %v464 = vtanh.pop %v459
        %465 = vst [vmem:[%s332] sm:$0xff] %v464
        %s466 = sand.u32 %s199, 1
        %s467 = scalar_lea.sflag [#allocation3], %s466
        %s468 = sand.u32 %s199, 1
        %s469 = smul.addr %s468, 8
        %s470 = scalar_lea.vmem [#allocation2], %s469
        // Predicated region
        $region45: #{tpu_custom_call.1} parent=43 // pred_check
          %p471 = pneg %p209
        $region46: #{tpu_custom_call.1} parent=43 // pred_check_branch
          %473 = sbr.rel (%p471) target = $region48
        $region47: #{tpu_custom_call.1} parent=43 // pred_region
          %s475 = ssub.s32 128, 128
          %476 = vsyncadd %s467, %s475
          %s477 = sadd.s32 %s25, %s24
          %s478 = smul.addr %s477, 128
          %s479 = scalar_lea.hbm %s6, %s478
          %s481 = sshll.u32 %s470, 4
          %s482 = int_to_ptr.vmem [resolvable:$true] %s481
          %484 = dma.vmem_to_hbm [thread:$0]  %s482, 128, %s479, %s467
        $region48: #{tpu_custom_call.1} parent=43 // pred_fallthru
          _
      $region44: #{tpu_custom_call.1} parent=5 // pred_fallthru
        _
      %p485 = scmp.le.s32.totalorder 2, %s15
      // Predicated region
      $region49: #{tpu_custom_call.1} parent=5 // pred_check
        %p486 = pneg %p485
      $region50: #{tpu_custom_call.1} parent=5 // pred_check_branch
        %488 = sbr.rel (%p486) target = $region52
      $region51: #{tpu_custom_call.1} parent=5 // pred_region
        %s489 = ssub.s32 %s15, 2
        // Predicated region
        $region53: #{tpu_custom_call.1} parent=51 // pred_check
          %p490 = pneg %p215
        $region54: #{tpu_custom_call.1} parent=51 // pred_check_branch
          %492 = sbr.rel (%p490) target = $region56
        $region55: #{tpu_custom_call.1} parent=51 // pred_region
          %s493 = sand.u32 %s200, 1
          %s494 = scalar_lea.sflag [#allocation3], %s493
          %s495 = sand.u32 %s200, 1
          %s496 = smul.addr %s495, 8
          %s497 = scalar_lea.vmem [#allocation2], %s496
          %498 = dma.done %s494, 128
        $region56: #{tpu_custom_call.1} parent=51 // pred_fallthru
          _
      $region52: #{tpu_custom_call.1} parent=5 // pred_fallthru
        _
    $region6: #{tpu_custom_call.1} parent=1 // loop_footer
      %s19 = sadd.s32 1, %s15
    $region7: #{tpu_custom_call.1} parent=1 // loop_footer_branch
      %14 = sbr.rel target = $region3
    $region8: #{tpu_custom_call.1} parent=1 // loop_exit
      _
    %499 = vsyncpa [#allocation3], 1
    %s500 = scalar_lea.sflag [#allocation3], 1
    %501 = vsyncpa %s500, 1

</llo_original>
